<compile_context>
chip_gen: v5e
topology: v5e:2x2
jax: 0.10.0
libtpu: 0.0.40
codegen_flags: <defaults>
</compile_context>

<pallas_src>
import jax
import jax.numpy as jnp
from jax.experimental import pallas as pl
from jax.experimental.pallas import tpu as pltpu


# ----------------------------- helpers ------------------------------------ #

def _round_up(n: int, m: int) -> int:
    return ((n + m - 1) // m) * m


def _pad2d(a, rows: int, cols: int, fill: float = 0.0):
    out = jnp.full((rows, cols), fill, a.dtype)
    return out.at[: a.shape[0], : a.shape[1]].set(a)


# ------------------------------ kernel ------------------------------------ #

def _classifier_kernel(x_ref, w1_ref, b1_ref, w2_ref, b2_ref,
                       w3_ref, b3_ref, w4_ref, b4_ref, out_ref):
    """One batch tile of the 4-layer MLP + log_softmax. All dims 128-padded."""
    cd = w1_ref.dtype  # compute dtype (bf16); f32 accumulation on the MXU

    # Hidden layer 1: Linear + ReLU (dropout = identity in eval). The f32->bf16
    # cast of the streamed x tile happens here on the VPU (free next to MXU).
    h = jnp.dot(x_ref[...].astype(cd), w1_ref[...],
                preferred_element_type=jnp.float32)
    h = jnp.maximum(h + b1_ref[...], 0.0)

    # Hidden layer 2: Linear + ReLU
    h = jnp.dot(h.astype(cd), w2_ref[...], preferred_element_type=jnp.float32)
    h = jnp.maximum(h + b2_ref[...], 0.0)

    # Hidden layer 3: Linear + ReLU
    h = jnp.dot(h.astype(cd), w3_ref[...], preferred_element_type=jnp.float32)
    h = jnp.maximum(h + b3_ref[...], 0.0)

    # Output layer: Linear + log_softmax over the class dim. The padded class
    # lanes carry a -1e30 bias (baked in at prepare time), so exp() of them is
    # exactly 0 and they contribute nothing to the normalization.
    logits = jnp.dot(h.astype(cd), w4_ref[...],
                     preferred_element_type=jnp.float32) + b4_ref[...]

    m = jnp.max(logits, axis=-1, keepdims=True)
    shifted = logits - m
    lse = jnp.log(jnp.sum(jnp.exp(shifted), axis=-1, keepdims=True))
    out_ref[...] = shifted - lse


# ------------------------------ wrapper ------------------------------------ #

def classifier_forward(x, prep, *, tile_b: int = 1024):
    """Run the padded classifier.

    x: (B, d_in) f32. prep: 128-padded params (weights bf16 (in,out), biases
    f32 (1,out) with padded class lanes of b4 set to -1e30).

    Returns the PADDED output buffer of shape (round_up(B, tile), out_padded),
    f32 log-probabilities.  Consumers must slice [:B, :num_classes]; padded
    class lanes hold ~-1e30 and padded batch rows are meaningless.
    """
    w1, b1 = prep["w1"], prep["b1"]
    w2, b2 = prep["w2"], prep["b2"]
    w3, b3 = prep["w3"], prep["b3"]
    w4, b4 = prep["w4"], prep["b4"]

    B, d_in = x.shape
    d_in_p = w1.shape[0]
    out_p = w4.shape[1]

    # Batch tile: large by default (amortizes the ~0.35 us per-grid-step
    # overhead), but never bigger than ~ceil(B/2) rounded to 16 so batches
    # above one tile always split into >=2 balanced tiles (keeps both v7x
    # TensorCores busy; harmless on v5e/v6e).
    tile_b = max(16, min(tile_b, _round_up(pl.cdiv(B, 2), 16)))
    b_pad = _round_up(B, tile_b)

    # Stream x in its native f32 layout.  Only materialize a padded copy when
    # the batch/feature dims actually need it (they don't for aligned inputs).
    if b_pad != B or d_in_p != d_in:
        x_p = jnp.zeros((b_pad, d_in_p), x.dtype).at[:B, :d_in].set(x)
    else:
        x_p = x

    grid = (b_pad // tile_b,)

    def _resident(a):  # full-shape block, constant index_map -> DMA'd once
        return pl.BlockSpec(a.shape, lambda i, _nd=a.ndim: (0,) * _nd)

    out = pl.pallas_call(
        _classifier_kernel,
        out_shape=jax.ShapeDtypeStruct((b_pad, out_p), jnp.float32),
        grid_spec=pltpu.PrefetchScalarGridSpec(
            num_scalar_prefetch=0,
            grid=grid,
            in_specs=[
                pl.BlockSpec((tile_b, d_in_p), lambda i: (i, 0)),
                _resident(w1), _resident(b1),
                _resident(w2), _resident(b2),
                _resident(w3), _resident(b3),
                _resident(w4), _resident(b4),
            ],
            out_specs=pl.BlockSpec((tile_b, out_p), lambda i: (i, 0)),
        ),
        compiler_params=pltpu.CompilerParams(
            dimension_semantics=("parallel",),
            vmem_limit_bytes=32 * 1024 * 1024,
        ),
    )(x_p, w1, b1, w2, b2, w3, b3, w4, b4)

    return out


# --------------------------- params / reference ----------------------------- #

def init_params(key, input_layer, hidden_layers, output):
    """Synthetic PyTorch-style init; weights stored as (in, out), f32, logical dims."""
    dims = [input_layer] + list(hidden_layers) + [output]
    params = {}
    for i, (din, dout) in enumerate(zip(dims[:-1], dims[1:])):
        key, kw, kb = jax.random.split(key, 3)
        bound = 1.0 / float(din) ** 0.5
        params[f"w{i + 1}"] = jax.random.uniform(
            kw, (din, dout), jnp.float32, minval=-bound, maxval=bound)
        params[f"b{i + 1}"] = jax.random.uniform(
            kb, (1, dout), jnp.float32, minval=-bound, maxval=bound)
    return params


def prepare_params(params, compute_dtype=jnp.bfloat16):
    """Zero-pad every feature dim to a multiple of 128; cast weights to bf16.

    The class-dim padding mask is baked into b4: padded bias lanes are set to
    -1e30 so the kernel needs no per-step iota/where before the softmax.
    """
    d_in = params["w1"].shape[0]
    h1, h2, h3, n_out = (params["w1"].shape[1], params["w2"].shape[1],
                         params["w3"].shape[1], params["w4"].shape[1])
    d_in_p, h1_p, h2_p, h3_p, out_p = (
        _round_up(d, 128) for d in (d_in, h1, h2, h3, n_out))
    prep = {
        "w1": _pad2d(params["w1"], d_in_p, h1_p).astype(compute_dtype),
        "b1": _pad2d(params["b1"], 1, h1_p),
        "w2": _pad2d(params["w2"], h1_p, h2_p).astype(compute_dtype),
        "b2": _pad2d(params["b2"], 1, h2_p),
        "w3": _pad2d(params["w3"], h2_p, h3_p).astype(compute_dtype),
        "b3": _pad2d(params["b3"], 1, h3_p),
        "w4": _pad2d(params["w4"], h3_p, out_p).astype(compute_dtype),
        "b4": _pad2d(params["b4"], 1, out_p, fill=-1e30),
    }
    return prep


def reference_forward_f32(x, params):
    """Plain-JAX f32 reference (exact PyTorch-module semantics, eval mode)."""
    h = jnp.maximum(x @ params["w1"] + params["b1"], 0.0)
    h = jnp.maximum(h @ params["w2"] + params["b2"], 0.0)
    h = jnp.maximum(h @ params["w3"] + params["b3"], 0.0)
    logits = h @ params["w4"] + params["b4"]
    return jax.nn.log_softmax(logits, axis=1)


def reference_forward_prepared(x, prep, num_classes):
    """Plain-JAX reference following the kernel's bf16/padded math path."""
    cd = prep["w1"].dtype
    d_in_p = prep["w1"].shape[0]
    xp = jnp.zeros((x.shape[0], d_in_p), jnp.float32).at[:, : x.shape[1]].set(x)
    h = jnp.maximum(jnp.dot(xp.astype(cd), prep["w1"],
                            preferred_element_type=jnp.float32) + prep["b1"], 0.0)
    h = jnp.maximum(jnp.dot(h.astype(cd), prep["w2"],
                            preferred_element_type=jnp.float32) + prep["b2"], 0.0)
    h = jnp.maximum(jnp.dot(h.astype(cd), prep["w3"],
                            preferred_element_type=jnp.float32) + prep["b3"], 0.0)
    logits = jnp.dot(h.astype(cd), prep["w4"],
                     preferred_element_type=jnp.float32) + prep["b4"]
    logits = logits[:, :num_classes]
    return jax.nn.log_softmax(logits, axis=1)


# ------------------------------- main -------------------------------------- #

if __name__ == "__main__":
    # Small shapes consistent with the module: batch=8, input=256,
    # hidden_layers=[128, 64, 64], output=102 classes (PyTorch default).
    key = jax.random.PRNGKey(0)
    key, kx = jax.random.split(key)

    B, D_IN = 8, 256
    HIDDEN = [128, 64, 64]
    OUT = 102

    x = jax.random.normal(kx, (B, D_IN), dtype=jnp.float32)
    params = init_params(key, D_IN, HIDDEN, OUT)
    prep = prepare_params(params)

    y_pad = classifier_forward(x, prep)
    y_pad = jax.block_until_ready(y_pad)
    y = y_pad[:B, :OUT]  # consumer-side slice of the padded output buffer
    assert y.shape == (B, OUT)

    # Tight check vs a JAX reference that follows the same bf16/padded path.
    y_ref_bf16 = reference_forward_prepared(x, prep, OUT)
    assert jnp.allclose(y, y_ref_bf16, atol=2e-3, rtol=2e-3), "mismatch vs bf16 reference"

    # Loose check vs the pure-f32 PyTorch-semantics reference (bf16 weight quantization).
    y_ref_f32 = reference_forward_f32(x, params)
    assert jnp.allclose(y, y_ref_f32, atol=5e-2, rtol=5e-2), "mismatch vs f32 reference"

    # log_softmax rows should sum (in prob space) to ~1.
    assert jnp.allclose(jnp.sum(jnp.exp(y), axis=1), 1.0, atol=1e-3)

    print("KERNEL_OK")
</pallas_src>

<mosaic_0001>
module attributes {stable_mosaic.version = 11 : i64} {
  func.func @_classifier_kernel(%arg0: i32, %arg1: memref<16x256xf32, #tpu.memory_space<vmem>>, %arg2: memref<256x128xbf16, #tpu.memory_space<vmem>>, %arg3: memref<1x128xf32, #tpu.memory_space<vmem>>, %arg4: memref<128x128xbf16, #tpu.memory_space<vmem>>, %arg5: memref<1x128xf32, #tpu.memory_space<vmem>>, %arg6: memref<128x128xbf16, #tpu.memory_space<vmem>>, %arg7: memref<1x128xf32, #tpu.memory_space<vmem>>, %arg8: memref<128x128xbf16, #tpu.memory_space<vmem>>, %arg9: memref<1x128xf32, #tpu.memory_space<vmem>>, %arg10: memref<16x128xf32, #tpu.memory_space<vmem>>) attributes {dimension_semantics = [#tpu.dimension_semantics<parallel>], iteration_bounds = array<i64: 1>, scalar_prefetch = 0 : i64, scratch_operands = 0 : i64, tpu.core_type = #tpu.core_type<tc>, window_params = [{transform_indices = @transform_0, window_bounds = array<i64: 16, 256>}, {pipeline_mode = #tpu.pipeline_mode<synchronous>, transform_indices = @transform_1, window_bounds = array<i64: 256, 128>}, {pipeline_mode = #tpu.pipeline_mode<synchronous>, transform_indices = @transform_2, window_bounds = array<i64: 1, 128>}, {pipeline_mode = #tpu.pipeline_mode<synchronous>, transform_indices = @transform_3, window_bounds = array<i64: 128, 128>}, {pipeline_mode = #tpu.pipeline_mode<synchronous>, transform_indices = @transform_4, window_bounds = array<i64: 1, 128>}, {pipeline_mode = #tpu.pipeline_mode<synchronous>, transform_indices = @transform_5, window_bounds = array<i64: 128, 128>}, {pipeline_mode = #tpu.pipeline_mode<synchronous>, transform_indices = @transform_6, window_bounds = array<i64: 1, 128>}, {pipeline_mode = #tpu.pipeline_mode<synchronous>, transform_indices = @transform_7, window_bounds = array<i64: 128, 128>}, {pipeline_mode = #tpu.pipeline_mode<synchronous>, transform_indices = @transform_8, window_bounds = array<i64: 1, 128>}, {transform_indices = @transform_9, window_bounds = array<i64: 16, 128>}]} {
    %c0 = arith.constant 0 : index
    %c0_0 = arith.constant 0 : index
    %0 = vector.load %arg1[%c0, %c0_0] : memref<16x256xf32, #tpu.memory_space<vmem>>, vector<16x256xf32>
    %1 = arith.truncf %0 : vector<16x256xf32> to vector<16x256xbf16>
    %c0_1 = arith.constant 0 : index
    %c0_2 = arith.constant 0 : index
    %2 = vector.load %arg2[%c0_1, %c0_2] : memref<256x128xbf16, #tpu.memory_space<vmem>>, vector<256x128xbf16>
    %cst = arith.constant dense<0.000000e+00> : vector<16x128xf32>
    %3 = tpu.matmul %1, %2, %cst {dimension_numbers = #tpu.dot_dimension_numbers<[1], [0], [0], [1], [0, 0, 1, 1], [], []>} : vector<16x256xbf16>, vector<256x128xbf16>, vector<16x128xf32> -> vector<16x128xf32>
    %c0_3 = arith.constant 0 : index
    %c0_4 = arith.constant 0 : index
    %4 = vector.load %arg3[%c0_3, %c0_4] : memref<1x128xf32, #tpu.memory_space<vmem>>, vector<1x128xf32>
    %5 = vector.broadcast %4 : vector<1x128xf32> to vector<16x128xf32>
    %6 = arith.addf %3, %5 : vector<16x128xf32>
    %cst_5 = arith.constant 0.000000e+00 : f32
    %7 = vector.broadcast %cst_5 : f32 to vector<16x128xf32>
    %8 = arith.maximumf %6, %7 : vector<16x128xf32>
    %9 = arith.truncf %8 : vector<16x128xf32> to vector<16x128xbf16>
    %c0_6 = arith.constant 0 : index
    %c0_7 = arith.constant 0 : index
    %10 = vector.load %arg4[%c0_6, %c0_7] : memref<128x128xbf16, #tpu.memory_space<vmem>>, vector<128x128xbf16>
    %cst_8 = arith.constant dense<0.000000e+00> : vector<16x128xf32>
    %11 = tpu.matmul %9, %10, %cst_8 {dimension_numbers = #tpu.dot_dimension_numbers<[1], [0], [0], [1], [0, 0, 1, 1], [], []>} : vector<16x128xbf16>, vector<128x128xbf16>, vector<16x128xf32> -> vector<16x128xf32>
    %c0_9 = arith.constant 0 : index
    %c0_10 = arith.constant 0 : index
    %12 = vector.load %arg5[%c0_9, %c0_10] : memref<1x128xf32, #tpu.memory_space<vmem>>, vector<1x128xf32>
    %13 = vector.broadcast %12 : vector<1x128xf32> to vector<16x128xf32>
    %14 = arith.addf %11, %13 : vector<16x128xf32>
    %cst_11 = arith.constant 0.000000e+00 : f32
    %15 = vector.broadcast %cst_11 : f32 to vector<16x128xf32>
    %16 = arith.maximumf %14, %15 : vector<16x128xf32>
    %17 = arith.truncf %16 : vector<16x128xf32> to vector<16x128xbf16>
    %c0_12 = arith.constant 0 : index
    %c0_13 = arith.constant 0 : index
    %18 = vector.load %arg6[%c0_12, %c0_13] : memref<128x128xbf16, #tpu.memory_space<vmem>>, vector<128x128xbf16>
    %cst_14 = arith.constant dense<0.000000e+00> : vector<16x128xf32>
    %19 = tpu.matmul %17, %18, %cst_14 {dimension_numbers = #tpu.dot_dimension_numbers<[1], [0], [0], [1], [0, 0, 1, 1], [], []>} : vector<16x128xbf16>, vector<128x128xbf16>, vector<16x128xf32> -> vector<16x128xf32>
    %c0_15 = arith.constant 0 : index
    %c0_16 = arith.constant 0 : index
    %20 = vector.load %arg7[%c0_15, %c0_16] : memref<1x128xf32, #tpu.memory_space<vmem>>, vector<1x128xf32>
    %21 = vector.broadcast %20 : vector<1x128xf32> to vector<16x128xf32>
    %22 = arith.addf %19, %21 : vector<16x128xf32>
    %cst_17 = arith.constant 0.000000e+00 : f32
    %23 = vector.broadcast %cst_17 : f32 to vector<16x128xf32>
    %24 = arith.maximumf %22, %23 : vector<16x128xf32>
    %25 = arith.truncf %24 : vector<16x128xf32> to vector<16x128xbf16>
    %c0_18 = arith.constant 0 : index
    %c0_19 = arith.constant 0 : index
    %26 = vector.load %arg8[%c0_18, %c0_19] : memref<128x128xbf16, #tpu.memory_space<vmem>>, vector<128x128xbf16>
    %cst_20 = arith.constant dense<0.000000e+00> : vector<16x128xf32>
    %27 = tpu.matmul %25, %26, %cst_20 {dimension_numbers = #tpu.dot_dimension_numbers<[1], [0], [0], [1], [0, 0, 1, 1], [], []>} : vector<16x128xbf16>, vector<128x128xbf16>, vector<16x128xf32> -> vector<16x128xf32>
    %c0_21 = arith.constant 0 : index
    %c0_22 = arith.constant 0 : index
    %28 = vector.load %arg9[%c0_21, %c0_22] : memref<1x128xf32, #tpu.memory_space<vmem>>, vector<1x128xf32>
    %29 = vector.broadcast %28 : vector<1x128xf32> to vector<16x128xf32>
    %30 = arith.addf %27, %29 : vector<16x128xf32>
    %cst_23 = arith.constant dense<0xFF800000> : vector<16xf32>
    %31 = vector.multi_reduction <maximumf>, %30, %cst_23 [1] : vector<16x128xf32> to vector<16xf32>
    %32 = vector.shape_cast %31 : vector<16xf32> to vector<16x1xf32>
    %33 = vector.broadcast %32 : vector<16x1xf32> to vector<16x128xf32>
    %34 = arith.subf %30, %33 : vector<16x128xf32>
    %35 = math.exp %34 : vector<16x128xf32>
    %cst_24 = arith.constant dense<0.000000e+00> : vector<16xf32>
    %36 = vector.multi_reduction <add>, %35, %cst_24 [1] : vector<16x128xf32> to vector<16xf32>
    %37 = vector.shape_cast %36 : vector<16xf32> to vector<16x1xf32>
    %38 = math.log %37 : vector<16x1xf32>
    %39 = vector.broadcast %38 : vector<16x1xf32> to vector<16x128xf32>
    %40 = arith.subf %34, %39 : vector<16x128xf32>
    %c0_25 = arith.constant 0 : index
    %c0_26 = arith.constant 0 : index
    %41 = vector.load %arg10[%c0_25, %c0_26] : memref<16x128xf32, #tpu.memory_space<vmem>>, vector<16x128xf32>
    tpu.vector_store %arg10[%c0_25, %c0_26], %40 {strides = array<i32>} : memref<16x128xf32, #tpu.memory_space<vmem>>, vector<16x128xf32>,
    return
  }
  func.func @transform_0(%arg0: i32) -> (i32, i32) {
    %c0_i32 = arith.constant 0 : i32
    %c0_i32_0 = arith.constant 0 : i32
    return %arg0, %c0_i32 : i32, i32
  }
  func.func @transform_1(%arg0: i32) -> (i32, i32) {
    %c0_i32 = arith.constant 0 : i32
    %c0_i32_0 = arith.constant 0 : i32
    %c0_i32_1 = arith.constant 0 : i32
    return %c0_i32, %c0_i32_0 : i32, i32
  }
  func.func @transform_2(%arg0: i32) -> (i32, i32) {
    %c0_i32 = arith.constant 0 : i32
    %c0_i32_0 = arith.constant 0 : i32
    %c0_i32_1 = arith.constant 0 : i32
    return %c0_i32, %c0_i32_0 : i32, i32
  }
  func.func @transform_3(%arg0: i32) -> (i32, i32) {
    %c0_i32 = arith.constant 0 : i32
    %c0_i32_0 = arith.constant 0 : i32
    %c0_i32_1 = arith.constant 0 : i32
    return %c0_i32, %c0_i32_0 : i32, i32
  }
  func.func @transform_4(%arg0: i32) -> (i32, i32) {
    %c0_i32 = arith.constant 0 : i32
    %c0_i32_0 = arith.constant 0 : i32
    %c0_i32_1 = arith.constant 0 : i32
    return %c0_i32, %c0_i32_0 : i32, i32
  }
  func.func @transform_5(%arg0: i32) -> (i32, i32) {
    %c0_i32 = arith.constant 0 : i32
    %c0_i32_0 = arith.constant 0 : i32
    %c0_i32_1 = arith.constant 0 : i32
    return %c0_i32, %c0_i32_0 : i32, i32
  }
  func.func @transform_6(%arg0: i32) -> (i32, i32) {
    %c0_i32 = arith.constant 0 : i32
    %c0_i32_0 = arith.constant 0 : i32
    %c0_i32_1 = arith.constant 0 : i32
    return %c0_i32, %c0_i32_0 : i32, i32
  }
  func.func @transform_7(%arg0: i32) -> (i32, i32) {
    %c0_i32 = arith.constant 0 : i32
    %c0_i32_0 = arith.constant 0 : i32
    %c0_i32_1 = arith.constant 0 : i32
    return %c0_i32, %c0_i32_0 : i32, i32
  }
  func.func @transform_8(%arg0: i32) -> (i32, i32) {
    %c0_i32 = arith.constant 0 : i32
    %c0_i32_0 = arith.constant 0 : i32
    %c0_i32_1 = arith.constant 0 : i32
    return %c0_i32, %c0_i32_0 : i32, i32
  }
  func.func @transform_9(%arg0: i32) -> (i32, i32) {
    %c0_i32 = arith.constant 0 : i32
    %c0_i32_0 = arith.constant 0 : i32
    return %arg0, %c0_i32 : i32, i32
  }
}

</mosaic_0001>

<llo_original>
// kernel: tpu_custom_call.1
$region0: #{tpu_custom_call.1}
  #allocation0 [shape = 'u32[]', space=smem, size = 0x4, offset = 0x4, fixed_abs, tag = 'smem constant byte address 0x4 - core index']
  #allocation1 [shape = 'u32[72,128]{1,0:T(1,128)}', space=vmem, size = 0x9000, scoped, tag = 'internal scratch']
  %s0 = inlined_call_operand.hbm [shape: f32[16,256], index: 0, kind: input, shape index: {}]
  %s1 = inlined_call_operand.hbm [shape: bf16[256,128], index: 1, kind: input, shape index: {}]
  %s2 = inlined_call_operand.vmem [shape: f32[1,128], index: 2, kind: input, shape index: {}]
  %s3 = inlined_call_operand.hbm [shape: bf16[128,128], index: 3, kind: input, shape index: {}]
  %s4 = inlined_call_operand.vmem [shape: f32[1,128], index: 4, kind: input, shape index: {}]
  %s5 = inlined_call_operand.hbm [shape: bf16[128,128], index: 5, kind: input, shape index: {}]
  %s6 = inlined_call_operand.vmem [shape: f32[1,128], index: 6, kind: input, shape index: {}]
  %s7 = inlined_call_operand.hbm [shape: bf16[128,128], index: 7, kind: input, shape index: {}]
  %s8 = inlined_call_operand.vmem [shape: f32[1,128], index: 8, kind: input, shape index: {}]
  %s9 = inlined_call_operand.hbm [shape: f32[16,128], index: 9, kind: output, shape index: {}]
  %s10 = sld [smem:[#allocation0]]
  $region66: #{tpu_custom_call.1} parent=0
    _
  %s12 = ssub.s32 1, %s10
  %s13 = scalar_select 0, %s12, %s10
  $region1: #{tpu_custom_call.1} parent=0
    #allocation2 [shape = 'u8[16384]{0}', space=vmem, size = 0x4000, scoped, tag = 'input window, operand 0, single buffered']
    #allocation3 [shape = 's32[1]{0}', space=sflag, size = 0x4, scoped, tag = 'scoped memory for tpu_custom_call.1']
    #allocation4 [shape = 's32[1]{0}', space=sflag, size = 0x4, scoped, tag = 'scoped memory for tpu_custom_call.1']
    #allocation5 [shape = 'u8[65536]{0}', space=vmem, size = 0x10000, scoped, tag = 'input window, operand 1, single buffered']
    #allocation6 [shape = 's32[1]{0}', space=sflag, size = 0x4, scoped, tag = 'scoped memory for tpu_custom_call.1']
    #allocation7 [shape = 'u8[32768]{0}', space=vmem, size = 0x8000, scoped, tag = 'input window, operand 3, single buffered']
    #allocation8 [shape = 'u8[32768]{0}', space=vmem, size = 0x8000, scoped, tag = 'input window, operand 5, single buffered']
    #allocation9 [shape = 's32[1]{0}', space=sflag, size = 0x4, scoped, tag = 'scoped memory for tpu_custom_call.1']
    #allocation10 [shape = 'u8[32768]{0}', space=vmem, size = 0x8000, scoped, tag = 'input window, operand 7, single buffered']
    #allocation11 [shape = 'u8[8192]{0}', space=vmem, size = 0x2000, scoped, tag = 'output window, operand 0, single buffered']
    %14 = vsyncpa [#allocation3], 0
    %15 = vsyncpa [#allocation6], 0
    %16 = vsyncpa [#allocation9], 0
    %17 = vsyncpa [#allocation4], 0
    // Predicated region
    $region2: #{tpu_custom_call.1} parent=1 // pred_check
      _
    $region3: #{tpu_custom_call.1} parent=1 // pred_check_branch
      %19 = sbr.rel (0) target = $region5
    $region4: #{tpu_custom_call.1} parent=1 // pred_region
      %21 = vsyncadd [#allocation3], 0
      %s22 = sshll.u32 %s0, 4
      %s23 = int_to_ptr.hbm [resolvable:$true] %s22
      %s24 = sshll.u32 [#allocation2], 4
      %s25 = int_to_ptr.vmem [resolvable:$true] %s24
      %30 = dma.hbm_to_vmem [thread:$0]  %s23, 512, %s25, [#allocation3], 256, 256, 16
    $region5: #{tpu_custom_call.1} parent=1 // pred_fallthru
      _
    // Predicated region
    $region6: #{tpu_custom_call.1} parent=1 // pred_check
      _
    $region7: #{tpu_custom_call.1} parent=1 // pred_check_branch
      %32 = sbr.rel (0) target = $region9
    $region8: #{tpu_custom_call.1} parent=1 // pred_region
      %34 = vsyncadd [#allocation6], 0
      %s35 = sshll.u32 %s1, 4
      %s36 = int_to_ptr.hbm [resolvable:$true] %s35
      %s37 = sshll.u32 [#allocation5], 4
      %s38 = int_to_ptr.vmem [resolvable:$true] %s37
      %43 = dma.hbm_to_vmem [thread:$0]  %s36, 2048, %s38, [#allocation6], 64, 64, 4
    $region9: #{tpu_custom_call.1} parent=1 // pred_fallthru
      _
    // Predicated region
    $region10: #{tpu_custom_call.1} parent=1 // pred_check
      _
    $region11: #{tpu_custom_call.1} parent=1 // pred_check_branch
      %45 = sbr.rel (0) target = $region13
    $region12: #{tpu_custom_call.1} parent=1 // pred_region
      _
    $region13: #{tpu_custom_call.1} parent=1 // pred_fallthru
      _
    // Predicated region
    $region14: #{tpu_custom_call.1} parent=1 // pred_check
      _
    $region15: #{tpu_custom_call.1} parent=1 // pred_check_branch
      %47 = sbr.rel (0) target = $region17
    $region16: #{tpu_custom_call.1} parent=1 // pred_region
      %49 = vsyncadd [#allocation6], 0
      %s50 = sshll.u32 %s3, 4
      %s51 = int_to_ptr.hbm [resolvable:$true] %s50
      %s52 = sshll.u32 [#allocation7], 4
      %s53 = int_to_ptr.vmem [resolvable:$true] %s52
      %58 = dma.hbm_to_vmem [thread:$0]  %s51, 1024, %s53, [#allocation6], 64, 64, 4
    $region17: #{tpu_custom_call.1} parent=1 // pred_fallthru
      _
    // Predicated region
    $region18: #{tpu_custom_call.1} parent=1 // pred_check
      _
    $region19: #{tpu_custom_call.1} parent=1 // pred_check_branch
      %60 = sbr.rel (0) target = $region21
    $region20: #{tpu_custom_call.1} parent=1 // pred_region
      _
    $region21: #{tpu_custom_call.1} parent=1 // pred_fallthru
      _
    // Predicated region
    $region22: #{tpu_custom_call.1} parent=1 // pred_check
      _
    $region23: #{tpu_custom_call.1} parent=1 // pred_check_branch
      %62 = sbr.rel (0) target = $region25
    $region24: #{tpu_custom_call.1} parent=1 // pred_region
      %64 = vsyncadd [#allocation9], 0
      %s65 = sshll.u32 %s5, 4
      %s66 = int_to_ptr.hbm [resolvable:$true] %s65
      %s67 = sshll.u32 [#allocation8], 4
      %s68 = int_to_ptr.vmem [resolvable:$true] %s67
      %73 = dma.hbm_to_vmem [thread:$0]  %s66, 1024, %s68, [#allocation9], 64, 64, 4
    $region25: #{tpu_custom_call.1} parent=1 // pred_fallthru
      _
    // Predicated region
    $region26: #{tpu_custom_call.1} parent=1 // pred_check
      _
    $region27: #{tpu_custom_call.1} parent=1 // pred_check_branch
      %75 = sbr.rel (0) target = $region29
    $region28: #{tpu_custom_call.1} parent=1 // pred_region
      _
    $region29: #{tpu_custom_call.1} parent=1 // pred_fallthru
      _
    // Predicated region
    $region30: #{tpu_custom_call.1} parent=1 // pred_check
      _
    $region31: #{tpu_custom_call.1} parent=1 // pred_check_branch
      %77 = sbr.rel (0) target = $region33
    $region32: #{tpu_custom_call.1} parent=1 // pred_region
      %79 = vsyncadd [#allocation9], 0
      %s80 = sshll.u32 %s7, 4
      %s81 = int_to_ptr.hbm [resolvable:$true] %s80
      %s82 = sshll.u32 [#allocation10], 4
      %s83 = int_to_ptr.vmem [resolvable:$true] %s82
      %88 = dma.hbm_to_vmem [thread:$0]  %s81, 1024, %s83, [#allocation9], 64, 64, 4
    $region33: #{tpu_custom_call.1} parent=1 // pred_fallthru
      _
    // Predicated region
    $region34: #{tpu_custom_call.1} parent=1 // pred_check
      _
    $region35: #{tpu_custom_call.1} parent=1 // pred_check_branch
      %90 = sbr.rel (0) target = $region37
    $region36: #{tpu_custom_call.1} parent=1 // pred_region
      _
    $region37: #{tpu_custom_call.1} parent=1 // pred_fallthru
      _
    // Predicated region
    $region38: #{tpu_custom_call.1} parent=1 // pred_check
      _
    $region39: #{tpu_custom_call.1} parent=1 // pred_check_branch
      %92 = sbr.rel (0) target = $region41
    $region40: #{tpu_custom_call.1} parent=1 // pred_region
      %94 = dma.done [#allocation3], 512
    $region41: #{tpu_custom_call.1} parent=1 // pred_fallthru
      _
    // Predicated region
    $region42: #{tpu_custom_call.1} parent=1 // pred_check
      _
    $region43: #{tpu_custom_call.1} parent=1 // pred_check_branch
      %96 = sbr.rel (0) target = $region45
    $region44: #{tpu_custom_call.1} parent=1 // pred_region
      %98 = dma.done [#allocation6], 2048
    $region45: #{tpu_custom_call.1} parent=1 // pred_fallthru
      _
    // Predicated region
    $region46: #{tpu_custom_call.1} parent=1 // pred_check
      _
    $region47: #{tpu_custom_call.1} parent=1 // pred_check_branch
      %100 = sbr.rel (0) target = $region49
    $region48: #{tpu_custom_call.1} parent=1 // pred_region
      %102 = dma.done [#allocation6], 1024
    $region49: #{tpu_custom_call.1} parent=1 // pred_fallthru
      _
    // Predicated region
    $region50: #{tpu_custom_call.1} parent=1 // pred_check
      _
    $region51: #{tpu_custom_call.1} parent=1 // pred_check_branch
      %104 = sbr.rel (0) target = $region53
    $region52: #{tpu_custom_call.1} parent=1 // pred_region
      %106 = dma.done [#allocation9], 1024
    $region53: #{tpu_custom_call.1} parent=1 // pred_fallthru
      _
    // Predicated region
    $region54: #{tpu_custom_call.1} parent=1 // pred_check
      _
    $region55: #{tpu_custom_call.1} parent=1 // pred_check_branch
      %108 = sbr.rel (0) target = $region57
    $region56: #{tpu_custom_call.1} parent=1 // pred_region
      %110 = dma.done [#allocation9], 1024
    $region57: #{tpu_custom_call.1} parent=1 // pred_fallthru
      _
    %v111 = vld [vmem:[#allocation2] sm:$0xff]
    %v112 = vld [vmem:[#allocation2 + $0x8] sm:$0xff]
    %v113 = vld [vmem:[#allocation2 + $0x10] sm:$0xff]
    %v114 = vld [vmem:[#allocation2 + $0x18] sm:$0xff]
    %v115 = vpack.c.bf16 %v113, %v111
    %v116 = vpack.c.bf16 %v114, %v112
    %v117 = vld [vmem:[#allocation5] sm:$0xf]
    %v118 = vld [vmem:[#allocation5 + $0x4] sm:$0xf]
    %v119 = vld [vmem:[#allocation5 + $0x8] sm:$0xf]
    %v120 = vld [vmem:[#allocation5 + $0xc] sm:$0xf]
    %v121 = vld [vmem:[#allocation5 + $0x10] sm:$0xf]
    %v122 = vld [vmem:[#allocation5 + $0x14] sm:$0xf]
    %v123 = vld [vmem:[#allocation5 + $0x18] sm:$0xf]
    %v124 = vld [vmem:[#allocation5 + $0x1c] sm:$0xf]
    %v125 = vld [vmem:[#allocation5 + $0x20] sm:$0xf]
    %v126 = vld [vmem:[#allocation5 + $0x24] sm:$0xf]
    %v127 = vld [vmem:[#allocation5 + $0x28] sm:$0xf]
    %v128 = vld [vmem:[#allocation5 + $0x2c] sm:$0xf]
    %v129 = vld [vmem:[#allocation5 + $0x30] sm:$0xf]
    %v130 = vld [vmem:[#allocation5 + $0x34] sm:$0xf]
    %v131 = vld [vmem:[#allocation5 + $0x38] sm:$0xf]
    %v132 = vld [vmem:[#allocation5 + $0x3c] sm:$0xf]
    %v133 = vld [vmem:[#allocation5 + $0x40] sm:$0xf]
    %v134 = vld [vmem:[#allocation5 + $0x44] sm:$0xf]
    %v135 = vld [vmem:[#allocation5 + $0x48] sm:$0xf]
    %v136 = vld [vmem:[#allocation5 + $0x4c] sm:$0xf]
    %v137 = vld [vmem:[#allocation5 + $0x50] sm:$0xf]
    %v138 = vld [vmem:[#allocation5 + $0x54] sm:$0xf]
    %v139 = vld [vmem:[#allocation5 + $0x58] sm:$0xf]
    %v140 = vld [vmem:[#allocation5 + $0x5c] sm:$0xf]
    %v141 = vld [vmem:[#allocation5 + $0x60] sm:$0xf]
    %v142 = vld [vmem:[#allocation5 + $0x64] sm:$0xf]
    %v143 = vld [vmem:[#allocation5 + $0x68] sm:$0xf]
    %v144 = vld [vmem:[#allocation5 + $0x6c] sm:$0xf]
    %v145 = vld [vmem:[#allocation5 + $0x70] sm:$0xf]
    %v146 = vld [vmem:[#allocation5 + $0x74] sm:$0xf]
    %v147 = vld [vmem:[#allocation5 + $0x78] sm:$0xf]
    %v148 = vld [vmem:[#allocation5 + $0x7c] sm:$0xf]
    %v149 = vld [vmem:[%s2] sm:$0x1]
    %v151 = vperm.slane %v149, 0
    %v185 = vunpack.c.l.b16 %v117
    %v186 = vunpack.c.l.b16 %v118
    %v187 = vunpack.c.l.b16 %v119
    %v188 = vunpack.c.l.b16 %v120
    %v189 = vunpack.c.l.b16 %v121
    %v190 = vunpack.c.l.b16 %v122
    %v191 = vunpack.c.l.b16 %v123
    %v192 = vunpack.c.l.b16 %v124
    %v193 = vunpack.c.l.b16 %v125
    %v194 = vunpack.c.l.b16 %v126
    %v195 = vunpack.c.l.b16 %v127
    %v196 = vunpack.c.l.b16 %v128
    %v197 = vunpack.c.l.b16 %v129
    %v198 = vunpack.c.l.b16 %v130
    %v199 = vunpack.c.l.b16 %v131
    %v200 = vunpack.c.l.b16 %v132
    %v201 = vunpack.c.l.b16 %v133
    %v202 = vunpack.c.l.b16 %v134
    %v203 = vunpack.c.l.b16 %v135
    %v204 = vunpack.c.l.b16 %v136
    %v205 = vunpack.c.l.b16 %v137
    %v206 = vunpack.c.l.b16 %v138
    %v207 = vunpack.c.l.b16 %v139
    %v208 = vunpack.c.l.b16 %v140
    %v209 = vunpack.c.l.b16 %v141
    %v210 = vunpack.c.l.b16 %v142
    %v211 = vunpack.c.l.b16 %v143
    %v212 = vunpack.c.l.b16 %v144
    %v213 = vunpack.c.l.b16 %v145
    %v214 = vunpack.c.l.b16 %v146
    %v215 = vunpack.c.l.b16 %v147
    %v216 = vunpack.c.l.b16 %v148
    %v217 = vpack.c.b16 %v186, %v185
    %v218 = vpack.c.b16 %v188, %v187
    %v219 = vpack.c.b16 %v190, %v189
    %v220 = vpack.c.b16 %v192, %v191
    %v221 = vpack.c.b16 %v194, %v193
    %v222 = vpack.c.b16 %v196, %v195
    %v223 = vpack.c.b16 %v198, %v197
    %v224 = vpack.c.b16 %v200, %v199
    %v225 = vpack.c.b16 %v202, %v201
    %v226 = vpack.c.b16 %v204, %v203
    %v227 = vpack.c.b16 %v206, %v205
    %v228 = vpack.c.b16 %v208, %v207
    %v229 = vpack.c.b16 %v210, %v209
    %v230 = vpack.c.b16 %v212, %v211
    %v231 = vpack.c.b16 %v214, %v213
    %v232 = vpack.c.b16 %v216, %v215
    %249 = vmatpush.bf16.msra.mxu0 %v224
    %250 = vmatpush.bf16.msra.mxu0 %v223
    %251 = vmatpush.bf16.msra.mxu0 %v222
    %252 = vmatpush.bf16.msra.mxu0 %v221
    %253 = vmatpush.bf16.msra.mxu0 %v220
    %254 = vmatpush.bf16.msra.mxu0 %v219
    %255 = vmatpush.bf16.msra.mxu0 %v218
    %256 = vmatpush.bf16.msra.mxu0 %v217
    %257 = vmatmul.bf16.gmra.mxu0 %v115
    %v258 = vpop.f32.mrf.mxu0
    %v259 = vadd.f32 %v151, %v258
    %v260 = vpop.f32.mrf.mxu0
    %v261 = vadd.f32 %v151, %v260
    %262 = vdwg.mxu0
    %263 = vmatpush.bf16.msra.mxu0 %v232
    %264 = vmatpush.bf16.msra.mxu0 %v231
    %265 = vmatpush.bf16.msra.mxu0 %v230
    %266 = vmatpush.bf16.msra.mxu0 %v229
    %267 = vmatpush.bf16.msra.mxu0 %v228
    %268 = vmatpush.bf16.msra.mxu0 %v227
    %269 = vmatpush.bf16.msra.mxu0 %v226
    %270 = vmatpush.bf16.msra.mxu0 %v225
    %271 = vmatmul.bf16.gmra.mxu0 %v116
    %v272 = vpop.f32.mrf.mxu0
    %v273 = vadd.f32 %v259, %v272
    %v274 = vpop.f32.mrf.mxu0
    %v275 = vadd.f32 %v261, %v274
    %276 = vdwg.mxu0
    %v277 = vmax.f32 %v273, 0.0
    %v278 = vmax.f32 %v275, 0.0
    %v279 = vpack.c.bf16 %v278, %v277
    %v280 = vld [vmem:[#allocation7] sm:$0xf]
    %v281 = vld [vmem:[#allocation7 + $0x4] sm:$0xf]
    %v282 = vld [vmem:[#allocation7 + $0x8] sm:$0xf]
    %v283 = vld [vmem:[#allocation7 + $0xc] sm:$0xf]
    %v284 = vld [vmem:[#allocation7 + $0x10] sm:$0xf]
    %v285 = vld [vmem:[#allocation7 + $0x14] sm:$0xf]
    %v286 = vld [vmem:[#allocation7 + $0x18] sm:$0xf]
    %v287 = vld [vmem:[#allocation7 + $0x1c] sm:$0xf]
    %v288 = vld [vmem:[#allocation7 + $0x20] sm:$0xf]
    %v289 = vld [vmem:[#allocation7 + $0x24] sm:$0xf]
    %v290 = vld [vmem:[#allocation7 + $0x28] sm:$0xf]
    %v291 = vld [vmem:[#allocation7 + $0x2c] sm:$0xf]
    %v292 = vld [vmem:[#allocation7 + $0x30] sm:$0xf]
    %v293 = vld [vmem:[#allocation7 + $0x34] sm:$0xf]
    %v294 = vld [vmem:[#allocation7 + $0x38] sm:$0xf]
    %v295 = vld [vmem:[#allocation7 + $0x3c] sm:$0xf]
    %v296 = vld [vmem:[%s4] sm:$0x1]
    %v298 = vperm.slane %v296, 0
    %v316 = vunpack.c.l.b16 %v280
    %v317 = vunpack.c.l.b16 %v281
    %v318 = vunpack.c.l.b16 %v282
    %v319 = vunpack.c.l.b16 %v283
    %v320 = vunpack.c.l.b16 %v284
    %v321 = vunpack.c.l.b16 %v285
    %v322 = vunpack.c.l.b16 %v286
    %v323 = vunpack.c.l.b16 %v287
    %v324 = vunpack.c.l.b16 %v288
    %v325 = vunpack.c.l.b16 %v289
    %v326 = vunpack.c.l.b16 %v290
    %v327 = vunpack.c.l.b16 %v291
    %v328 = vunpack.c.l.b16 %v292
    %v329 = vunpack.c.l.b16 %v293
    %v330 = vunpack.c.l.b16 %v294
    %v331 = vunpack.c.l.b16 %v295
    %v332 = vpack.c.b16 %v317, %v316
    %v333 = vpack.c.b16 %v319, %v318
    %v334 = vpack.c.b16 %v321, %v320
    %v335 = vpack.c.b16 %v323, %v322
    %v336 = vpack.c.b16 %v325, %v324
    %v337 = vpack.c.b16 %v327, %v326
    %v338 = vpack.c.b16 %v329, %v328
    %v339 = vpack.c.b16 %v331, %v330
    %348 = vmatpush.bf16.msra.mxu0 %v339
    %349 = vmatpush.bf16.msra.mxu0 %v338
    %350 = vmatpush.bf16.msra.mxu0 %v337
    %351 = vmatpush.bf16.msra.mxu0 %v336
    %352 = vmatpush.bf16.msra.mxu0 %v335
    %353 = vmatpush.bf16.msra.mxu0 %v334
    %354 = vmatpush.bf16.msra.mxu0 %v333
    %355 = vmatpush.bf16.msra.mxu0 %v332
    %356 = vmatmul.bf16.gmra.mxu0 %v279
    %v357 = vpop.f32.mrf.mxu0
    %v358 = vadd.f32 %v298, %v357
    %v359 = vpop.f32.mrf.mxu0
    %v360 = vadd.f32 %v298, %v359
    %361 = vdwg.mxu0
    %v362 = vmax.f32 %v358, 0.0
    %v363 = vmax.f32 %v360, 0.0
    %v364 = vpack.c.bf16 %v363, %v362
    %v365 = vld [vmem:[#allocation8] sm:$0xf]
    %v366 = vld [vmem:[#allocation8 + $0x4] sm:$0xf]
    %v367 = vld [vmem:[#allocation8 + $0x8] sm:$0xf]
    %v368 = vld [vmem:[#allocation8 + $0xc] sm:$0xf]
    %v369 = vld [vmem:[#allocation8 + $0x10] sm:$0xf]
    %v370 = vld [vmem:[#allocation8 + $0x14] sm:$0xf]
    %v371 = vld [vmem:[#allocation8 + $0x18] sm:$0xf]
    %v372 = vld [vmem:[#allocation8 + $0x1c] sm:$0xf]
    %v373 = vld [vmem:[#allocation8 + $0x20] sm:$0xf]
    %v374 = vld [vmem:[#allocation8 + $0x24] sm:$0xf]
    %v375 = vld [vmem:[#allocation8 + $0x28] sm:$0xf]
    %v376 = vld [vmem:[#allocation8 + $0x2c] sm:$0xf]
    %v377 = vld [vmem:[#allocation8 + $0x30] sm:$0xf]
    %v378 = vld [vmem:[#allocation8 + $0x34] sm:$0xf]
    %v379 = vld [vmem:[#allocation8 + $0x38] sm:$0xf]
    %v380 = vld [vmem:[#allocation8 + $0x3c] sm:$0xf]
    %v381 = vld [vmem:[%s6] sm:$0x1]
    %v383 = vperm.slane %v381, 0
    %v401 = vunpack.c.l.b16 %v365
    %v402 = vunpack.c.l.b16 %v366
    %v403 = vunpack.c.l.b16 %v367
    %v404 = vunpack.c.l.b16 %v368
    %v405 = vunpack.c.l.b16 %v369
    %v406 = vunpack.c.l.b16 %v370
    %v407 = vunpack.c.l.b16 %v371
    %v408 = vunpack.c.l.b16 %v372
    %v409 = vunpack.c.l.b16 %v373
    %v410 = vunpack.c.l.b16 %v374
    %v411 = vunpack.c.l.b16 %v375
    %v412 = vunpack.c.l.b16 %v376
    %v413 = vunpack.c.l.b16 %v377
    %v414 = vunpack.c.l.b16 %v378
    %v415 = vunpack.c.l.b16 %v379
    %v416 = vunpack.c.l.b16 %v380
    %v417 = vpack.c.b16 %v402, %v401
    %v418 = vpack.c.b16 %v404, %v403
    %v419 = vpack.c.b16 %v406, %v405
    %v420 = vpack.c.b16 %v408, %v407
    %v421 = vpack.c.b16 %v410, %v409
    %v422 = vpack.c.b16 %v412, %v411
    %v423 = vpack.c.b16 %v414, %v413
    %v424 = vpack.c.b16 %v416, %v415
    %433 = vmatpush.bf16.msra.mxu0 %v424
    %434 = vmatpush.bf16.msra.mxu0 %v423
    %435 = vmatpush.bf16.msra.mxu0 %v422
    %436 = vmatpush.bf16.msra.mxu0 %v421
    %437 = vmatpush.bf16.msra.mxu0 %v420
    %438 = vmatpush.bf16.msra.mxu0 %v419
    %439 = vmatpush.bf16.msra.mxu0 %v418
    %440 = vmatpush.bf16.msra.mxu0 %v417
    %441 = vmatmul.bf16.gmra.mxu0 %v364
    %v442 = vpop.f32.mrf.mxu0
    %v443 = vadd.f32 %v383, %v442
    %v444 = vpop.f32.mrf.mxu0
    %v445 = vadd.f32 %v383, %v444
    %446 = vdwg.mxu0
    %v447 = vmax.f32 %v443, 0.0
    %v448 = vmax.f32 %v445, 0.0
    %v449 = vpack.c.bf16 %v448, %v447
    %v450 = vld [vmem:[#allocation10] sm:$0xf]
    %v451 = vld [vmem:[#allocation10 + $0x4] sm:$0xf]
    %v452 = vld [vmem:[#allocation10 + $0x8] sm:$0xf]
    %v453 = vld [vmem:[#allocation10 + $0xc] sm:$0xf]
    %v454 = vld [vmem:[#allocation10 + $0x10] sm:$0xf]
    %v455 = vld [vmem:[#allocation10 + $0x14] sm:$0xf]
    %v456 = vld [vmem:[#allocation10 + $0x18] sm:$0xf]
    %v457 = vld [vmem:[#allocation10 + $0x1c] sm:$0xf]
    %v458 = vld [vmem:[#allocation10 + $0x20] sm:$0xf]
    %v459 = vld [vmem:[#allocation10 + $0x24] sm:$0xf]
    %v460 = vld [vmem:[#allocation10 + $0x28] sm:$0xf]
    %v461 = vld [vmem:[#allocation10 + $0x2c] sm:$0xf]
    %v462 = vld [vmem:[#allocation10 + $0x30] sm:$0xf]
    %v463 = vld [vmem:[#allocation10 + $0x34] sm:$0xf]
    %v464 = vld [vmem:[#allocation10 + $0x38] sm:$0xf]
    %v465 = vld [vmem:[#allocation10 + $0x3c] sm:$0xf]
    %v466 = vld [vmem:[%s8] sm:$0x1]
    %v468 = vperm.slane %v466, 0
    %v486 = vunpack.c.l.b16 %v450
    %v487 = vunpack.c.l.b16 %v451
    %v488 = vunpack.c.l.b16 %v452
    %v489 = vunpack.c.l.b16 %v453
    %v490 = vunpack.c.l.b16 %v454
    %v491 = vunpack.c.l.b16 %v455
    %v492 = vunpack.c.l.b16 %v456
    %v493 = vunpack.c.l.b16 %v457
    %v494 = vunpack.c.l.b16 %v458
    %v495 = vunpack.c.l.b16 %v459
    %v496 = vunpack.c.l.b16 %v460
    %v497 = vunpack.c.l.b16 %v461
    %v498 = vunpack.c.l.b16 %v462
    %v499 = vunpack.c.l.b16 %v463
    %v500 = vunpack.c.l.b16 %v464
    %v501 = vunpack.c.l.b16 %v465
    %v502 = vpack.c.b16 %v487, %v486
    %v503 = vpack.c.b16 %v489, %v488
    %v504 = vpack.c.b16 %v491, %v490
    %v505 = vpack.c.b16 %v493, %v492
    %v506 = vpack.c.b16 %v495, %v494
    %v507 = vpack.c.b16 %v497, %v496
    %v508 = vpack.c.b16 %v499, %v498
    %v509 = vpack.c.b16 %v501, %v500
    %518 = vmatpush.bf16.msra.mxu0 %v509
    %519 = vmatpush.bf16.msra.mxu0 %v508
    %520 = vmatpush.bf16.msra.mxu0 %v507
    %521 = vmatpush.bf16.msra.mxu0 %v506
    %522 = vmatpush.bf16.msra.mxu0 %v505
    %523 = vmatpush.bf16.msra.mxu0 %v504
    %524 = vmatpush.bf16.msra.mxu0 %v503
    %525 = vmatpush.bf16.msra.mxu0 %v502
    %526 = vmatmul.bf16.gmra.mxu0 %v449
    %v527 = vpop.f32.mrf.mxu0
    %v528 = vadd.f32 %v468, %v527
    %v529 = vpop.f32.mrf.mxu0
    %v530 = vadd.f32 %v468, %v529
    %531 = vdwg.mxu0
    %532 = vmax.xlane.f32.xlu0 %v528
    %v533 = vpop.xlane.xlu0 %532
    %534 = vmax.xlane.f32.xlu0 %v530
    %v535 = vpop.xlane.xlu0 %534
    %v536 = vsub.f32 %v528, %v533
    %v537 = vsub.f32 %v530, %v535
    %v538 = vmul.f32 %v536, 1.442695
    %v539 = vpow.pop %v538
    %v540 = vmul.f32 %v537, 1.442695
    %v541 = vpow.pop %v540
    %542 = vadd.xlane.f32.xlu0 %v539
    %v543 = vpop.xlane.xlu0 %542
    %544 = vadd.xlane.f32.xlu0 %v541
    %v545 = vpop.xlane.xlu0 %544
    %v546 = vlog2.pop %v543
    %v547 = vmul.f32 %v546, 0.6931472
    %v548 = vlog2.pop %v545
    %v549 = vmul.f32 %v548, 0.6931472
    %v550 = vsub.f32 %v536, %v547
    %v551 = vsub.f32 %v537, %v549
    %552 = vst [vmem:[#allocation11] sm:$0xff] %v550
    %553 = vst [vmem:[#allocation11 + $0x8] sm:$0xff] %v551
    // Predicated region
    $region58: #{tpu_custom_call.1} parent=1 // pred_check
      _
    $region59: #{tpu_custom_call.1} parent=1 // pred_check_branch
      %555 = sbr.rel (0) target = $region61
    $region60: #{tpu_custom_call.1} parent=1 // pred_region
      %557 = vsyncadd [#allocation4], 0
      %s558 = sshll.u32 [#allocation11], 4
      %s559 = int_to_ptr.vmem [resolvable:$true] %s558
      %s560 = sshll.u32 %s9, 4
      %s561 = int_to_ptr.hbm [resolvable:$true] %s560
      %566 = dma.vmem_to_hbm [thread:$0]  %s559, 256, %s561, [#allocation4], 128, 128, 8
    $region61: #{tpu_custom_call.1} parent=1 // pred_fallthru
      _
    // Predicated region
    $region62: #{tpu_custom_call.1} parent=1 // pred_check
      _
    $region63: #{tpu_custom_call.1} parent=1 // pred_check_branch
      %568 = sbr.rel (0) target = $region65
    $region64: #{tpu_custom_call.1} parent=1 // pred_region
      %570 = dma.done [#allocation4], 256
    $region65: #{tpu_custom_call.1} parent=1 // pred_fallthru
      _
    %571 = vsyncpa [#allocation3], 1
    %572 = vsyncpa [#allocation6], 1
    %573 = vsyncpa [#allocation9], 1
    %574 = vsyncpa [#allocation4], 1

</llo_original>
